<compile_context>
chip_gen: v7x
topology: tpu7x:2x2x1
jax: 0.10.0
libtpu: 0.0.40
codegen_flags: <defaults>
</compile_context>

<pallas_src>
import math
import functools

import jax
import jax.numpy as jnp
from jax.experimental import pallas as pl
from jax.experimental.pallas import tpu as pltpu


# --------------------------------- kernel ----------------------------------
# In-kernel layout: features on sublanes, tokens on the 128-wide lane axis, so
# every VPU/EUP/XLU op runs on dense vregs and the (1, tile) result row is
# lane-dense (unmasked stores except the clipped tail block).
#
#   x block : (tile, E)  row-major, transposed to (E, tile) on load
#   w_stack : (num_layers + 1, hid, D)   D = max(emb, hid); LN gain folded in
#   b_stack : (hid, num_layers + 1)      LN beta folded in; final bias at [0, -1]
#   out     : (1, tile)

def scoring_block_kernel(num_layers, emb_dim, hid_dim, bf16_acts, exact_gelu,
                         x_ref, w_ref, b_ref, o_ref):
    w_all = w_ref[...]                       # tiny, VMEM-resident, constant block
    b_all = b_ref[...]                       # (hid, num_layers + 1) f32
    mm_dtype = w_all.dtype                   # bf16 (host pre-cast) or f32
    act_dtype = jnp.bfloat16 if bf16_acts else jnp.float32

    def normalize(h, eps=1e-5):
        # LayerNorm statistics over the feature (sublane) axis, always in f32.
        hf = h.astype(jnp.float32)
        mu = jnp.mean(hf, axis=0, keepdims=True)
        xc = hf - mu
        var = jnp.mean(xc * xc, axis=0, keepdims=True)
        return xc, jax.lax.rsqrt(var + eps)

    def gelu(h):
        if exact_gelu:   # torch.nn.GELU() default (erf); VALU-heavy
            return 0.5 * h * (1.0 + jax.lax.erf(h * (1.0 / math.sqrt(2.0))))
        return jax.nn.gelu(h, approximate=True)          # tanh -> EUP slot

    # rows -> lanes: (tile, E) -> (E, tile)
    h = jnp.transpose(x_ref[...])

    # [LayerNorm (affine folded) -> Linear -> GELU] x num_layers
    in_dim = emb_dim
    for l in range(num_layers):
        xc, inv = normalize(h)
        w = w_all[l, :, :in_dim].astype(mm_dtype)                  # (hid, in)
        b = b_all[:, l:l + 1]                                      # (hid, 1)
        z = jnp.dot(w, (xc * inv).astype(mm_dtype),
                    preferred_element_type=jnp.float32) + b        # (hid, tile)
        h = gelu(z.astype(act_dtype))
        in_dim = hid_dim

    # final LayerNorm (affine folded) -> Linear(hid, 1); inv_std commutes with
    # the matmul, so scale the (1, tile) result instead of the (hid, tile) input.
    xc, inv = normalize(h)
    wf = w_all[num_layers, 0:1, :hid_dim].astype(mm_dtype)         # (1, hid)
    bf = b_all[0:1, num_layers:num_layers + 1]                     # (1, 1)
    r = jnp.dot(wf, xc.astype(mm_dtype),
                preferred_element_type=jnp.float32) * inv + bf     # (1, tile)
    o_ref[...] = (9.0 * jax.nn.sigmoid(r) + 1.0).astype(o_ref.dtype)


# ------------------------------ host wrapper --------------------------------

def _choose_tile(n_rows, max_tile):
    # Lane-aligned (multiple of 128), capped at max_tile (VMEM / v7x 64 MiB),
    # and sized so the grid has >= 2 steps whenever n_rows allows (both v7x
    # TensorCores get work under the "parallel" grid axis).
    half = -(-n_rows // 2)
    tile = min(max_tile, max(128, half))
    return ((tile + 127) // 128) * 128


def scoring_block(obs_rep, kernel_params, num_layers, *, max_tile=4096,
                  bf16_activations=False, exact_gelu=False):
    """Fused ScoringBlock forward. kernel_params = fold_and_pack_params(...)."""
    w_stack, b_stack = kernel_params
    B, S, E = obs_rep.shape
    hid = b_stack.shape[0]
    N = B * S

    x2d = obs_rep.reshape(N, E)            # free view; no host transpose / pad
    tile = _choose_tile(N, max_tile)
    grid = (pl.cdiv(N, tile),)             # partial last block masked by Pallas

    kernel = functools.partial(scoring_block_kernel, num_layers, E, hid,
                               bf16_activations, exact_gelu)
    out = pl.pallas_call(
        kernel,
        out_shape=jax.ShapeDtypeStruct((1, N), jnp.float32),
        grid=grid,
        in_specs=[
            pl.BlockSpec((tile, E), lambda i: (i, 0)),            # row tile
            pl.BlockSpec(w_stack.shape, lambda i: (0, 0, 0)),     # VMEM-resident
            pl.BlockSpec(b_stack.shape, lambda i: (0, 0)),        # VMEM-resident
        ],
        out_specs=pl.BlockSpec((1, tile), lambda i: (0, i)),      # lane-dense row
        compiler_params=pltpu.CompilerParams(
            dimension_semantics=("parallel",)),
    )(x2d, w_stack, b_stack)

    return out[0].reshape(B, S, 1)


# ------------------------- parameters (host side) ---------------------------

def _orthogonal(key, shape, gain):
    rows, cols = shape
    flip = rows < cols
    a = jax.random.normal(key, (cols, rows) if flip else (rows, cols), jnp.float32)
    q, r = jnp.linalg.qr(a)
    q = q * jnp.sign(jnp.diag(r))
    if flip:
        q = q.T
    return gain * q[:rows, :cols]


def make_params(key, emb_dim, hid_dim, num_layers):
    """torch-layout parameters, grouped per Linear as (ln_gain, ln_beta, W, b).
    LN params are made non-trivial so the affine-folding path is truly tested."""
    relu_gain = math.sqrt(2.0)                 # nn.init.calculate_gain('relu')
    keys = jax.random.split(key, 3 * (num_layers + 1))
    groups, in_dim, k = [], emb_dim, 0
    for _ in range(num_layers):
        g = 1.0 + 0.1 * jax.random.normal(keys[k], (in_dim,), jnp.float32)
        beta = 0.1 * jax.random.normal(keys[k + 1], (in_dim,), jnp.float32)
        W = _orthogonal(keys[k + 2], (hid_dim, in_dim), relu_gain)
        b = jnp.zeros((hid_dim,), jnp.float32)   # init_: bias = 0
        groups.append((g, beta, W, b))
        in_dim, k = hid_dim, k + 3
    g = 1.0 + 0.1 * jax.random.normal(keys[k], (hid_dim,), jnp.float32)
    beta = 0.1 * jax.random.normal(keys[k + 1], (hid_dim,), jnp.float32)
    W = _orthogonal(keys[k + 2], (1, hid_dim), 0.01)   # final layer gain = 0.01
    b = jnp.zeros((1,), jnp.float32)
    groups.append((g, beta, W, b))
    return groups


def fold_and_pack_params(groups, emb_dim, hid_dim, use_bf16_matmul=True):
    """Fold each LayerNorm affine into the following Linear and pack everything
    into two small arrays (one constant-index BlockSpec each):
      w_stack: (num_layers + 1, hid, max(emb, hid))   bf16 if requested
      b_stack: (hid, num_layers + 1)  f32; final bias lives at [0, -1]
    """
    D = max(emb_dim, hid_dim)
    ws, bs = [], []
    in_dim = emb_dim
    for g, beta, W, b in groups:
        Wf = W * g[None, :]                    # W @ diag(gain)
        bf = b + W @ beta                      # bias + W @ beta
        rows = W.shape[0]                      # hid, or 1 for the final layer
        ws.append(jnp.zeros((hid_dim, D), jnp.float32).at[:rows, :in_dim].set(Wf))
        bs.append(jnp.zeros((hid_dim,), jnp.float32).at[:rows].set(bf))
        in_dim = hid_dim
    w_stack = jnp.stack(ws, axis=0)
    b_stack = jnp.stack(bs, axis=1)
    if use_bf16_matmul:                        # MXU-native on v5e / v6e / v7x
        w_stack = w_stack.astype(jnp.bfloat16)
    return w_stack, b_stack


# ------------------------------ pure-JAX ref ---------------------------------

def scoring_block_ref(obs_rep, groups, exact_gelu=True):
    def ln(x, g, b, eps=1e-5):
        mu = jnp.mean(x, axis=-1, keepdims=True)
        var = jnp.mean((x - mu) ** 2, axis=-1, keepdims=True)
        return (x - mu) * jax.lax.rsqrt(var + eps) * g + b

    def gelu(x):
        if exact_gelu:                         # torch.nn.GELU() default (erf)
            return 0.5 * x * (1.0 + jax.lax.erf(x / math.sqrt(2.0)))
        return jax.nn.gelu(x, approximate=True)

    h = obs_rep
    for g, beta, W, b in groups[:-1]:
        h = gelu(ln(h, g, beta) @ W.T + b)
    g, beta, W, b = groups[-1]
    r = ln(h, g, beta) @ W.T + b
    return 9.0 * jax.nn.sigmoid(r) + 1.0


# ---------------------------------- main -------------------------------------

if __name__ == "__main__":
    B, S = 3, 100          # N = 300 rows -> 2 grid steps + a masked tail block
    EMB, HID = 32, 32
    NUM_LAYERS = 2

    key = jax.random.PRNGKey(0)
    k_obs, k_par = jax.random.split(key)
    obs_rep = jax.random.normal(k_obs, (B, S, EMB), jnp.float32)
    groups = make_params(k_par, EMB, HID, NUM_LAYERS)

    # 1) Tight check of layout + LN-affine folding (f32 matmul, identical GELU
    #    approximation on both sides).
    p_f32 = fold_and_pack_params(groups, EMB, HID, use_bf16_matmul=False)
    out = jax.block_until_ready(scoring_block(obs_rep, p_f32, NUM_LAYERS))
    ref_tanh = scoring_block_ref(obs_rep, groups, exact_gelu=False)
    assert out.shape == (B, S, 1)
    assert jnp.allclose(out, ref_tanh, atol=2e-4, rtol=2e-4), "f32 path mismatch"

    # 2) Production path: bf16 MXU matmuls (all generations) + tanh GELU,
    #    checked against the exact-erf torch-parity reference.
    p_bf16 = fold_and_pack_params(groups, EMB, HID, use_bf16_matmul=True)
    ref = scoring_block_ref(obs_rep, groups, exact_gelu=True)
    out = jax.block_until_ready(scoring_block(obs_rep, p_bf16, NUM_LAYERS))
    assert jnp.allclose(out, ref, atol=2e-2, rtol=2e-2), "bf16-matmul path mismatch"

    # 3) bf16 activations (recommended on v6e / v7x; keep f32 on v5e).
    out = jax.block_until_ready(
        scoring_block(obs_rep, p_bf16, NUM_LAYERS, bf16_activations=True))
    assert jnp.allclose(out, ref, atol=5e-2, rtol=5e-2), "bf16-act path mismatch"

    print("KERNEL_OK")
</pallas_src>

<mosaic_0001>
module attributes {stable_mosaic.version = 11 : i64} {
  func.func @scoring_block_kernel(%arg0: i32, %arg1: memref<256x32xf32, #tpu.memory_space<vmem>>, %arg2: memref<3x32x32xf32, #tpu.memory_space<vmem>>, %arg3: memref<32x3xf32, #tpu.memory_space<vmem>>, %arg4: memref<1x256xf32, #tpu.memory_space<vmem>>) attributes {dimension_semantics = [#tpu.dimension_semantics<parallel>], iteration_bounds = array<i64: 2>, scalar_prefetch = 0 : i64, scratch_operands = 0 : i64, tpu.core_type = #tpu.core_type<tc>, window_params = [{transform_indices = @transform_0, window_bounds = array<i64: 256, 32>}, {pipeline_mode = #tpu.pipeline_mode<synchronous>, transform_indices = @transform_1, window_bounds = array<i64: 3, 32, 32>}, {pipeline_mode = #tpu.pipeline_mode<synchronous>, transform_indices = @transform_2, window_bounds = array<i64: 32, 3>}, {transform_indices = @transform_3, window_bounds = array<i64: 1, 256>}]} {
    %c0 = arith.constant 0 : index
    %c0_0 = arith.constant 0 : index
    %c0_1 = arith.constant 0 : index
    %0 = vector.load %arg2[%c0, %c0_0, %c0_1] : memref<3x32x32xf32, #tpu.memory_space<vmem>>, vector<3x32x32xf32>
    %c0_2 = arith.constant 0 : index
    %c0_3 = arith.constant 0 : index
    %1 = vector.load %arg3[%c0_2, %c0_3] : memref<32x3xf32, #tpu.memory_space<vmem>>, vector<32x3xf32>
    %c0_4 = arith.constant 0 : index
    %c0_5 = arith.constant 0 : index
    %2 = vector.load %arg1[%c0_4, %c0_5] : memref<256x32xf32, #tpu.memory_space<vmem>>, vector<256x32xf32>
    %3 = tpu.transpose %2, [1, 0] : vector<256x32xf32> -> vector<32x256xf32>
    %cst = arith.constant dense<0.000000e+00> : vector<256xf32>
    %4 = vector.multi_reduction <add>, %3, %cst [0] : vector<32x256xf32> to vector<256xf32>
    %5 = vector.shape_cast %4 : vector<256xf32> to vector<1x256xf32>
    %cst_6 = arith.constant 3.200000e+01 : f32
    %6 = vector.broadcast %cst_6 : f32 to vector<1x256xf32>
    %7 = arith.divf %5, %6 : vector<1x256xf32>
    %8 = vector.broadcast %7 : vector<1x256xf32> to vector<32x256xf32>
    %9 = arith.subf %3, %8 : vector<32x256xf32>
    %10 = arith.mulf %9, %9 : vector<32x256xf32>
    %cst_7 = arith.constant dense<0.000000e+00> : vector<256xf32>
    %11 = vector.multi_reduction <add>, %10, %cst_7 [0] : vector<32x256xf32> to vector<256xf32>
    %12 = vector.shape_cast %11 : vector<256xf32> to vector<1x256xf32>
    %cst_8 = arith.constant 3.200000e+01 : f32
    %13 = vector.broadcast %cst_8 : f32 to vector<1x256xf32>
    %14 = arith.divf %12, %13 : vector<1x256xf32>
    %cst_9 = arith.constant 9.99999974E-6 : f32
    %15 = vector.broadcast %cst_9 : f32 to vector<1x256xf32>
    %16 = arith.addf %14, %15 : vector<1x256xf32>
    %17 = math.rsqrt %16 : vector<1x256xf32>
    %18 = vector.extract_strided_slice %0 {offsets = [0, 0, 0], sizes = [1, 32, 32], strides = [1, 1, 1]} : vector<3x32x32xf32> to vector<1x32x32xf32>
    %19 = vector.shape_cast %18 : vector<1x32x32xf32> to vector<32x32xf32>
    %20 = vector.extract_strided_slice %1 {offsets = [0, 0], sizes = [32, 1], strides = [1, 1]} : vector<32x3xf32> to vector<32x1xf32>
    %21 = vector.broadcast %17 : vector<1x256xf32> to vector<32x256xf32>
    %22 = arith.mulf %9, %21 : vector<32x256xf32>
    %cst_10 = arith.constant dense<0.000000e+00> : vector<32x256xf32>
    %23 = tpu.matmul %19, %22, %cst_10 {dimension_numbers = #tpu.dot_dimension_numbers<[1], [0], [0], [1], [0, 0, 1, 1], [], []>} : vector<32x32xf32>, vector<32x256xf32>, vector<32x256xf32> -> vector<32x256xf32>
    %24 = vector.broadcast %20 : vector<32x1xf32> to vector<32x256xf32>
    %25 = arith.addf %23, %24 : vector<32x256xf32>
    %26 = arith.mulf %25, %25 : vector<32x256xf32>
    %27 = arith.mulf %25, %26 : vector<32x256xf32>
    %cst_11 = arith.constant 4.471500e-02 : f32
    %28 = vector.broadcast %cst_11 : f32 to vector<32x256xf32>
    %29 = arith.mulf %28, %27 : vector<32x256xf32>
    %30 = arith.addf %25, %29 : vector<32x256xf32>
    %cst_12 = arith.constant 0.797884583 : f32
    %31 = vector.broadcast %cst_12 : f32 to vector<32x256xf32>
    %32 = arith.mulf %31, %30 : vector<32x256xf32>
    %33 = math.tanh %32 : vector<32x256xf32>
    %cst_13 = arith.constant 1.000000e+00 : f32
    %34 = vector.broadcast %cst_13 : f32 to vector<32x256xf32>
    %35 = arith.addf %34, %33 : vector<32x256xf32>
    %cst_14 = arith.constant 5.000000e-01 : f32
    %36 = vector.broadcast %cst_14 : f32 to vector<32x256xf32>
    %37 = arith.mulf %36, %35 : vector<32x256xf32>
    %38 = arith.mulf %25, %37 : vector<32x256xf32>
    %cst_15 = arith.constant dense<0.000000e+00> : vector<256xf32>
    %39 = vector.multi_reduction <add>, %38, %cst_15 [0] : vector<32x256xf32> to vector<256xf32>
    %40 = vector.shape_cast %39 : vector<256xf32> to vector<1x256xf32>
    %cst_16 = arith.constant 3.200000e+01 : f32
    %41 = vector.broadcast %cst_16 : f32 to vector<1x256xf32>
    %42 = arith.divf %40, %41 : vector<1x256xf32>
    %43 = vector.broadcast %42 : vector<1x256xf32> to vector<32x256xf32>
    %44 = arith.subf %38, %43 : vector<32x256xf32>
    %45 = arith.mulf %44, %44 : vector<32x256xf32>
    %cst_17 = arith.constant dense<0.000000e+00> : vector<256xf32>
    %46 = vector.multi_reduction <add>, %45, %cst_17 [0] : vector<32x256xf32> to vector<256xf32>
    %47 = vector.shape_cast %46 : vector<256xf32> to vector<1x256xf32>
    %cst_18 = arith.constant 3.200000e+01 : f32
    %48 = vector.broadcast %cst_18 : f32 to vector<1x256xf32>
    %49 = arith.divf %47, %48 : vector<1x256xf32>
    %cst_19 = arith.constant 9.99999974E-6 : f32
    %50 = vector.broadcast %cst_19 : f32 to vector<1x256xf32>
    %51 = arith.addf %49, %50 : vector<1x256xf32>
    %52 = math.rsqrt %51 : vector<1x256xf32>
    %53 = vector.extract_strided_slice %0 {offsets = [1, 0, 0], sizes = [1, 32, 32], strides = [1, 1, 1]} : vector<3x32x32xf32> to vector<1x32x32xf32>
    %54 = vector.shape_cast %53 : vector<1x32x32xf32> to vector<32x32xf32>
    %55 = vector.extract_strided_slice %1 {offsets = [0, 1], sizes = [32, 1], strides = [1, 1]} : vector<32x3xf32> to vector<32x1xf32>
    %56 = vector.broadcast %52 : vector<1x256xf32> to vector<32x256xf32>
    %57 = arith.mulf %44, %56 : vector<32x256xf32>
    %cst_20 = arith.constant dense<0.000000e+00> : vector<32x256xf32>
    %58 = tpu.matmul %54, %57, %cst_20 {dimension_numbers = #tpu.dot_dimension_numbers<[1], [0], [0], [1], [0, 0, 1, 1], [], []>} : vector<32x32xf32>, vector<32x256xf32>, vector<32x256xf32> -> vector<32x256xf32>
    %59 = vector.broadcast %55 : vector<32x1xf32> to vector<32x256xf32>
    %60 = arith.addf %58, %59 : vector<32x256xf32>
    %61 = arith.mulf %60, %60 : vector<32x256xf32>
    %62 = arith.mulf %60, %61 : vector<32x256xf32>
    %cst_21 = arith.constant 4.471500e-02 : f32
    %63 = vector.broadcast %cst_21 : f32 to vector<32x256xf32>
    %64 = arith.mulf %63, %62 : vector<32x256xf32>
    %65 = arith.addf %60, %64 : vector<32x256xf32>
    %cst_22 = arith.constant 0.797884583 : f32
    %66 = vector.broadcast %cst_22 : f32 to vector<32x256xf32>
    %67 = arith.mulf %66, %65 : vector<32x256xf32>
    %68 = math.tanh %67 : vector<32x256xf32>
    %cst_23 = arith.constant 1.000000e+00 : f32
    %69 = vector.broadcast %cst_23 : f32 to vector<32x256xf32>
    %70 = arith.addf %69, %68 : vector<32x256xf32>
    %cst_24 = arith.constant 5.000000e-01 : f32
    %71 = vector.broadcast %cst_24 : f32 to vector<32x256xf32>
    %72 = arith.mulf %71, %70 : vector<32x256xf32>
    %73 = arith.mulf %60, %72 : vector<32x256xf32>
    %cst_25 = arith.constant dense<0.000000e+00> : vector<256xf32>
    %74 = vector.multi_reduction <add>, %73, %cst_25 [0] : vector<32x256xf32> to vector<256xf32>
    %75 = vector.shape_cast %74 : vector<256xf32> to vector<1x256xf32>
    %cst_26 = arith.constant 3.200000e+01 : f32
    %76 = vector.broadcast %cst_26 : f32 to vector<1x256xf32>
    %77 = arith.divf %75, %76 : vector<1x256xf32>
    %78 = vector.broadcast %77 : vector<1x256xf32> to vector<32x256xf32>
    %79 = arith.subf %73, %78 : vector<32x256xf32>
    %80 = arith.mulf %79, %79 : vector<32x256xf32>
    %cst_27 = arith.constant dense<0.000000e+00> : vector<256xf32>
    %81 = vector.multi_reduction <add>, %80, %cst_27 [0] : vector<32x256xf32> to vector<256xf32>
    %82 = vector.shape_cast %81 : vector<256xf32> to vector<1x256xf32>
    %cst_28 = arith.constant 3.200000e+01 : f32
    %83 = vector.broadcast %cst_28 : f32 to vector<1x256xf32>
    %84 = arith.divf %82, %83 : vector<1x256xf32>
    %cst_29 = arith.constant 9.99999974E-6 : f32
    %85 = vector.broadcast %cst_29 : f32 to vector<1x256xf32>
    %86 = arith.addf %84, %85 : vector<1x256xf32>
    %87 = math.rsqrt %86 : vector<1x256xf32>
    %88 = vector.extract_strided_slice %0 {offsets = [2, 0, 0], sizes = [1, 1, 32], strides = [1, 1, 1]} : vector<3x32x32xf32> to vector<1x1x32xf32>
    %89 = vector.shape_cast %88 : vector<1x1x32xf32> to vector<1x32xf32>
    %90 = vector.extract_strided_slice %1 {offsets = [0, 2], sizes = [1, 1], strides = [1, 1]} : vector<32x3xf32> to vector<1x1xf32>
    %cst_30 = arith.constant dense<0.000000e+00> : vector<1x256xf32>
    %91 = tpu.matmul %89, %79, %cst_30 {dimension_numbers = #tpu.dot_dimension_numbers<[1], [0], [0], [1], [0, 0, 1, 1], [], []>} : vector<1x32xf32>, vector<32x256xf32>, vector<1x256xf32> -> vector<1x256xf32>
    %92 = arith.mulf %91, %87 : vector<1x256xf32>
    %93 = vector.broadcast %90 : vector<1x1xf32> to vector<1x256xf32>
    %94 = arith.addf %92, %93 : vector<1x256xf32>
    %95 = arith.negf %94 : vector<1x256xf32>
    %96 = math.exp %95 : vector<1x256xf32>
    %cst_31 = arith.constant 1.000000e+00 : f32
    %97 = vector.broadcast %cst_31 : f32 to vector<1x256xf32>
    %98 = arith.addf %97, %96 : vector<1x256xf32>
    %99 = arith.divf %97, %98 : vector<1x256xf32>
    %cst_32 = arith.constant 9.000000e+00 : f32
    %100 = vector.broadcast %cst_32 : f32 to vector<1x256xf32>
    %101 = arith.mulf %100, %99 : vector<1x256xf32>
    %cst_33 = arith.constant 1.000000e+00 : f32
    %102 = vector.broadcast %cst_33 : f32 to vector<1x256xf32>
    %103 = arith.addf %101, %102 : vector<1x256xf32>
    %c0_34 = arith.constant 0 : index
    %c0_35 = arith.constant 0 : index
    %104 = vector.load %arg4[%c0_34, %c0_35] : memref<1x256xf32, #tpu.memory_space<vmem>>, vector<1x256xf32>
    tpu.vector_store %arg4[%c0_34, %c0_35], %103 {strides = array<i32>} : memref<1x256xf32, #tpu.memory_space<vmem>>, vector<1x256xf32>,
    return
  }
  func.func @transform_0(%arg0: i32) -> (i32, i32) {
    %c0_i32 = arith.constant 0 : i32
    %c0_i32_0 = arith.constant 0 : i32
    return %arg0, %c0_i32 : i32, i32
  }
  func.func @transform_1(%arg0: i32) -> (i32, i32, i32) {
    %c0_i32 = arith.constant 0 : i32
    %c0_i32_0 = arith.constant 0 : i32
    %c0_i32_1 = arith.constant 0 : i32
    %c0_i32_2 = arith.constant 0 : i32
    return %c0_i32, %c0_i32_0, %c0_i32_1 : i32, i32, i32
  }
  func.func @transform_2(%arg0: i32) -> (i32, i32) {
    %c0_i32 = arith.constant 0 : i32
    %c0_i32_0 = arith.constant 0 : i32
    %c0_i32_1 = arith.constant 0 : i32
    return %c0_i32, %c0_i32_0 : i32, i32
  }
  func.func @transform_3(%arg0: i32) -> (i32, i32) {
    %c0_i32 = arith.constant 0 : i32
    %c0_i32_0 = arith.constant 0 : i32
    return %c0_i32, %arg0 : i32, i32
  }
}

</mosaic_0001>

<llo_original>
// kernel: tpu_custom_call.1
$region0: #{tpu_custom_call.1}
  #allocation0 [shape = 'u32[]', space=smem, size = 0x4, offset = 0x4, fixed_abs, tag = 'smem constant byte address 0x4 - core index']
  #allocation1 [shape = 'u32[144,128]{1,0:T(1,128)}', space=vmem, size = 0x12000, scoped, tag = 'internal scratch']
  %s0 = inlined_call_operand.vmem [shape: f32[300,32], index: 0, kind: input, shape index: {}]
  %s1 = inlined_call_operand.vmem [shape: f32[3,32,32], index: 1, kind: input, shape index: {}]
  %s2 = inlined_call_operand.vmem [shape: f32[32,3], index: 2, kind: input, shape index: {}]
  %s3 = inlined_call_operand.hbm [shape: f32[1,300], index: 3, kind: output, shape index: {}]
  %s4 = sld [smem:[#allocation0]]
  $region45: #{tpu_custom_call.1} parent=0
    _
  %s6 = ssub.s32 1, %s4
  %s7 = scalar_select 0, %s6, %s4
  $region1: #{tpu_custom_call.1} parent=0
    #allocation2 [shape = 'u8[2048]{0}', space=vmem, size = 0x800, scoped, tag = 'output window, operand 0']
    #allocation3 [shape = 's32[2]{0}', space=sflag, size = 0x8, scoped, tag = 'scoped memory for tpu_custom_call.1']
    %8 = vsyncpa [#allocation3], 0
    %s9 = scalar_lea.sflag [#allocation3], 1
    %10 = vsyncpa %s9, 0
    loop: start=0, step=1, limit=4
    $region2: #{tpu_custom_call.1} parent=1 // loop_pre_header
      _
    $region3: #{tpu_custom_call.1} parent=1 // loop_header
      %s12 = sphi 0, %s16
      %p13 = scmp.ge.s32.totalorder %s12, 4
      %s22 = sphi 0, %s24
      %s25 = sphi 0, %s22
      %s26 = sphi 0, %s25
      %s42 = sphi 0, %s26
      %s46 = sphi 0, %s46
      %s48 = sphi 0, %s46
      %s49 = sphi 0, %s48
      %s63 = sphi 0, %s49
      %s67 = sphi 0, %s67
      %s69 = sphi 0, %s67
      %s70 = sphi 0, %s69
      %s84 = sphi 0, %s70
      %s90 = sphi 0, %s92
      %s93 = sphi 0, %s90
      %s94 = sphi 0, %s93
      %s110 = sphi 0, %s94
    $region4: #{tpu_custom_call.1} parent=1 // loop_header_branch
      %15 = sbr.rel (%p13) target = $region8
    $region5: #{tpu_custom_call.1} parent=1 // loop_body
      %s17 = ssub.s32 %s12, 1
      %s18 = ssub.s32 %s12, 2
      %s19 = sadd.s32 %s12, 1
      %s20 = ssub.s32 %s12, %s19
      %p21 = scmp.eq.s32.totalorder %s20, 0
      %s23 = sadd.s32 %s22, 1
      %s24 = scalar_select %p21, %s22, %s23
      %p27 = pneg %p21
      %p28 = scmp.eq.s32.totalorder %s12, 1
      %p29 = por %p27, %p28
      %p30 = scmp.ne.s32.totalorder %s22, %s25
      %p31 = scmp.eq.s32.totalorder %s12, 0
      %p32 = por %p30, %p31
      %p33 = scmp.ne.s32.totalorder %s22, %s25
      %p34 = scmp.eq.s32.totalorder %s17, 1
      %p35 = por %p33, %p34
      %p36 = scmp.ne.s32.totalorder %s25, %s26
      %p37 = scmp.eq.s32.totalorder %s17, 0
      %p38 = por %p36, %p37
      %p39 = scmp.ne.s32.totalorder %s25, %s26
      %p40 = scmp.eq.s32.totalorder %s18, 1
      %p41 = por %p39, %p40
      %p43 = scmp.ne.s32.totalorder %s26, %s42
      %p44 = scmp.eq.s32.totalorder %s18, 0
      %p45 = por %p43, %p44
      %s47 = sadd.s32 %s46, 1
      %p50 = scmp.eq.s32.totalorder %s12, 1
      %p51 = scmp.ne.s32.totalorder %s46, %s48
      %p52 = scmp.eq.s32.totalorder %s12, 0
      %p53 = por %p51, %p52
      %p54 = scmp.ne.s32.totalorder %s46, %s48
      %p55 = scmp.eq.s32.totalorder %s17, 1
      %p56 = por %p54, %p55
      %p57 = scmp.ne.s32.totalorder %s48, %s49
      %p58 = scmp.eq.s32.totalorder %s17, 0
      %p59 = por %p57, %p58
      %p60 = scmp.ne.s32.totalorder %s48, %s49
      %p61 = scmp.eq.s32.totalorder %s18, 1
      %p62 = por %p60, %p61
      %p64 = scmp.ne.s32.totalorder %s49, %s63
      %p65 = scmp.eq.s32.totalorder %s18, 0
      %p66 = por %p64, %p65
      %s68 = sadd.s32 %s67, 1
      %p71 = scmp.eq.s32.totalorder %s12, 1
      %p72 = scmp.ne.s32.totalorder %s67, %s69
      %p73 = scmp.eq.s32.totalorder %s12, 0
      %p74 = por %p72, %p73
      %p75 = scmp.ne.s32.totalorder %s67, %s69
      %p76 = scmp.eq.s32.totalorder %s17, 1
      %p77 = por %p75, %p76
      %p78 = scmp.ne.s32.totalorder %s69, %s70
      %p79 = scmp.eq.s32.totalorder %s17, 0
      %p80 = por %p78, %p79
      %p81 = scmp.ne.s32.totalorder %s69, %s70
      %p82 = scmp.eq.s32.totalorder %s18, 1
      %p83 = por %p81, %p82
      %p85 = scmp.ne.s32.totalorder %s70, %s84
      %p86 = scmp.eq.s32.totalorder %s18, 0
      %p87 = por %p85, %p86
      %s88 = ssub.s32 %s12, %s19
      %p89 = scmp.eq.s32.totalorder %s88, 0
      %s91 = sadd.s32 %s90, 1
      %s92 = scalar_select %p89, %s90, %s91
      %p95 = pneg %p89
      %p96 = scmp.eq.s32.totalorder %s12, 1
      %p97 = por %p95, %p96
      %p98 = scmp.ne.s32.totalorder %s90, %s93
      %p99 = scmp.eq.s32.totalorder %s12, 0
      %p100 = por %p98, %p99
      %p101 = scmp.ne.s32.totalorder %s90, %s93
      %p102 = scmp.eq.s32.totalorder %s17, 1
      %p103 = por %p101, %p102
      %p104 = scmp.ne.s32.totalorder %s93, %s94
      %p105 = scmp.eq.s32.totalorder %s17, 0
      %p106 = por %p104, %p105
      %p107 = scmp.ne.s32.totalorder %s93, %s94
      %p108 = scmp.eq.s32.totalorder %s18, 1
      %p109 = por %p107, %p108
      %p111 = scmp.ne.s32.totalorder %s94, %s110
      %p112 = scmp.eq.s32.totalorder %s18, 0
      %p113 = por %p111, %p112
      %p114 = scmp.le.s32.totalorder 1, %s12
      %p115 = scmp.lt.s32.totalorder %s12, 3
      %p116 = pnand %p114, %p115
      %p117 = pneg %p116
      // Predicated region
      $region9: #{tpu_custom_call.1} parent=5 // pred_check
        _
      $region10: #{tpu_custom_call.1} parent=5 // pred_check_branch
        %119 = sbr.rel (%p116) target = $region12
      $region11: #{tpu_custom_call.1} parent=5 // pred_region
        %s120 = ssub.s32 %s12, 1
        // Predicated region
        $region13: #{tpu_custom_call.1} parent=11 // pred_check
          %p121 = pneg %p59
        $region14: #{tpu_custom_call.1} parent=11 // pred_check_branch
          %123 = sbr.rel (%p121) target = $region16
        $region15: #{tpu_custom_call.1} parent=11 // pred_region
          _
        $region16: #{tpu_custom_call.1} parent=11 // pred_fallthru
          _
        // Predicated region
        $region17: #{tpu_custom_call.1} parent=11 // pred_check
          %p124 = pneg %p80
        $region18: #{tpu_custom_call.1} parent=11 // pred_check_branch
          %126 = sbr.rel (%p124) target = $region20
        $region19: #{tpu_custom_call.1} parent=11 // pred_region
          _
        $region20: #{tpu_custom_call.1} parent=11 // pred_fallthru
          _
      $region12: #{tpu_custom_call.1} parent=5 // pred_fallthru
        _
      %p127 = scmp.lt.s32.totalorder %s12, 2
      // Predicated region
      $region21: #{tpu_custom_call.1} parent=5 // pred_check
        %p128 = pneg %p127
      $region22: #{tpu_custom_call.1} parent=5 // pred_check_branch
        %130 = sbr.rel (%p128) target = $region24
      $region23: #{tpu_custom_call.1} parent=5 // pred_region
        // Predicated region
        $region25: #{tpu_custom_call.1} parent=23 // pred_check
          %p131 = pneg %p32
        $region26: #{tpu_custom_call.1} parent=23 // pred_check_branch
          %133 = sbr.rel (%p131) target = $region28
        $region27: #{tpu_custom_call.1} parent=23 // pred_region
          %s134 = smul.u32 32, %s12
          %s135 = ssub.s32 38, %s134
          %p136 = scmp.lt.s32.totalorder %s135, 32
          %s137 = scalar_select %p136, %s135, 32
          %s138 = smul.u32 128, %s137
          %p139 = scmp.lt.s32.totalorder %s134, 37
          %s140 = scalar_select %p139, %s134, 37
          %s141 = smul.addr %s140, 8
          %s142 = scalar_lea.vmem %s0, %s141
          %s143 = smul.u32 32, %s12
          %s144 = ssub.s32 38, %s143
          %p145 = scmp.lt.s32.totalorder %s144, 32
          %s146 = scalar_select %p145, %s144, 32
          %s147 = smul.u32 128, %s146
        $region28: #{tpu_custom_call.1} parent=23 // pred_fallthru
          _
      $region24: #{tpu_custom_call.1} parent=5 // pred_fallthru
        _
      %p148 = scmp.le.s32.totalorder 1, %s12
      %p149 = scmp.lt.s32.totalorder %s12, 3
      %p150 = pnand %p148, %p149
      %p151 = pneg %p150
      // Predicated region
      $region29: #{tpu_custom_call.1} parent=5 // pred_check
        _
      $region30: #{tpu_custom_call.1} parent=5 // pred_check_branch
        %153 = sbr.rel (%p150) target = $region32
      $region31: #{tpu_custom_call.1} parent=5 // pred_region
        %s154 = ssub.s32 %s12, 1
        %s155 = smul.u32 32, %s17
        %s156 = ssub.s32 38, %s155
        %p157 = scmp.lt.s32.totalorder %s156, 32
        %s158 = scalar_select %p157, %s156, 32
        %s159 = smul.u32 128, %s158
        %p160 = scmp.lt.s32.totalorder %s155, 37
        %s161 = scalar_select %p160, %s155, 37
        %s162 = smul.addr %s161, 8
        %s163 = scalar_lea.vmem %s0, %s162
        %p164 = pneg %p38
        %p165 = pneg %p35
        %p166 = pneg %p59
        %p167 = pneg %p56
        %p168 = pneg %p80
        %p169 = pneg %p77
        %p170 = pneg %p106
        %p171 = pneg %p103
        %s172 = sand.u32 %s93, 1
        %s173 = scalar_lea.sflag [#allocation3], %s172
        %s174 = sand.u32 %s93, 1
        %s175 = smul.addr %s174, 2
        %s176 = scalar_lea.vmem [#allocation2], %s175
        %s177 = smul.u32 32, %s17
        %s178 = ssub.s32 38, %s177
        %p179 = scmp.lt.s32.totalorder %s178, 32
        %s180 = scalar_select %p179, %s178, 32
        %s181 = smul.u32 128, %s180
        %p182 = scmp.lt.s32.totalorder %s177, 37
        %s183 = scalar_select %p182, %s177, 37
        %s184 = smul.addr %s183, 8
        %s185 = scalar_lea.vmem %s0, %s184
        %s186 = smul.u32 32, %s17
        %s187 = ssub.s32 38, %s186
        %p188 = scmp.lt.s32.totalorder %s187, 32
        %s189 = scalar_select %p188, %s187, 32
        %s190 = smul.u32 128, %s189
        %s191 = smul.u32 2, %s17
        %s192 = ssub.s32 3, %s191
        %p193 = scmp.lt.s32.totalorder %s192, 2
        %s194 = scalar_select %p193, %s192, 2
        %s195 = smul.u32 16, %s194
        %v196 = vld [vmem:[%s1] sm:$0xff]
        %v197 = vld [vmem:[%s1 + $0x8] sm:$0xff]
        %v198 = vld [vmem:[%s1 + $0x10] sm:$0xff]
        %v199 = vld [vmem:[%s1 + $0x18] sm:$0xff]
        %v200 = vld [vmem:[%s1 + $0x20] sm:$0xff]
        %v201 = vld [vmem:[%s1 + $0x28] sm:$0xff]
        %v202 = vld [vmem:[%s1 + $0x30] sm:$0xff]
        %v203 = vld [vmem:[%s1 + $0x38] sm:$0xff]
        %v204 = vld [vmem:[%s1 + $0x40] sm:$0xff]
        %v205 = vld [vmem:[%s2] sm:$0xff]
        %v206 = vld [vmem:[%s2 + $0x8] sm:$0xff]
        %v207 = vld [vmem:[%s2 + $0x10] sm:$0xff]
        %v208 = vld [vmem:[%s2 + $0x18] sm:$0xff]
        %v209 = vld [vmem:[%s185] sm:$0xff]
        %v210 = vld [vmem:[%s185 + $0x8] sm:$0xff]
        %v211 = vld [vmem:[%s185 + $0x10] sm:$0xff]
        %v212 = vld [vmem:[%s185 + $0x18] sm:$0xff]
        %v213 = vld [vmem:[%s185 + $0x20] sm:$0xff]
        %v214 = vld [vmem:[%s185 + $0x28] sm:$0xff]
        %v215 = vld [vmem:[%s185 + $0x30] sm:$0xff]
        %v216 = vld [vmem:[%s185 + $0x38] sm:$0xff]
        %v217 = vld [vmem:[%s185 + $0x40] sm:$0xff]
        %v218 = vld [vmem:[%s185 + $0x48] sm:$0xff]
        %v219 = vld [vmem:[%s185 + $0x50] sm:$0xff]
        %v220 = vld [vmem:[%s185 + $0x58] sm:$0xff]
        %v221 = vld [vmem:[%s185 + $0x60] sm:$0xff]
        %v222 = vld [vmem:[%s185 + $0x68] sm:$0xff]
        %v223 = vld [vmem:[%s185 + $0x70] sm:$0xff]
        %v224 = vld [vmem:[%s185 + $0x78] sm:$0xff]
        %v225 = vld [vmem:[%s185 + $0x80] sm:$0xff]
        %v226 = vld [vmem:[%s185 + $0x88] sm:$0xff]
        %v227 = vld [vmem:[%s185 + $0x90] sm:$0xff]
        %v228 = vld [vmem:[%s185 + $0x98] sm:$0xff]
        %v229 = vld [vmem:[%s185 + $0xa0] sm:$0xff]
        %v230 = vld [vmem:[%s185 + $0xa8] sm:$0xff]
        %v231 = vld [vmem:[%s185 + $0xb0] sm:$0xff]
        %v232 = vld [vmem:[%s185 + $0xb8] sm:$0xff]
        %v233 = vld [vmem:[%s185 + $0xc0] sm:$0xff]
        %v234 = vld [vmem:[%s185 + $0xc8] sm:$0xff]
        %v235 = vld [vmem:[%s185 + $0xd0] sm:$0xff]
        %v236 = vld [vmem:[%s185 + $0xd8] sm:$0xff]
        %v237 = vld [vmem:[%s185 + $0xe0] sm:$0xff]
        %v238 = vld [vmem:[%s185 + $0xe8] sm:$0xff]
        %v239 = vld [vmem:[%s185 + $0xf0] sm:$0xff]
        %v240 = vld [vmem:[%s185 + $0xf8] sm:$0xff]
        %241 = vxpose.xlu0.b32.start [1/16] %v209, 128
        %242 = vxpose.xlu0.b32.cont [2/16] %v210, 128
        %243 = vxpose.xlu0.b32.cont [3/16] %v211, 128
        %244 = vxpose.xlu0.b32.cont [4/16] %v212, 128
        %245 = vxpose.xlu0.b32.cont [5/16] %v213, 128
        %246 = vxpose.xlu0.b32.cont [6/16] %v214, 128
        %247 = vxpose.xlu0.b32.cont [7/16] %v215, 128
        %248 = vxpose.xlu0.b32.cont [8/16] %v216, 128
        %249 = vxpose.xlu0.b32.cont [9/16] %v217, 128
        %250 = vxpose.xlu0.b32.cont [10/16] %v218, 128
        %251 = vxpose.xlu0.b32.cont [11/16] %v219, 128
        %252 = vxpose.xlu0.b32.cont [12/16] %v220, 128
        %253 = vxpose.xlu0.b32.cont [13/16] %v221, 128
        %254 = vxpose.xlu0.b32.cont [14/16] %v222, 128
        %255 = vxpose.xlu0.b32.cont [15/16] %v223, 128
        %256 = vxpose.xlu0.b32.end [16/16] %v224, 128
        %v257 = vpop.trf.xlu0
        %v258 = vpop.trf.xlu0
        %v259 = vpop.trf.xlu0
        %v260 = vpop.trf.xlu0
        %v261 = vpop.trf.xlu0
        %v262 = vpop.trf.xlu0
        %v263 = vpop.trf.xlu0
        %v264 = vpop.trf.xlu0
        %v265 = vpop.trf.xlu0
        %v266 = vpop.trf.xlu0
        %v267 = vpop.trf.xlu0
        %v268 = vpop.trf.xlu0
        %v269 = vpop.trf.xlu0
        %v270 = vpop.trf.xlu0
        %v271 = vpop.trf.xlu0
        %v272 = vpop.trf.xlu0
        %273 = vxpose.xlu0.b32.start [1/16] %v225, 128
        %274 = vxpose.xlu0.b32.cont [2/16] %v226, 128
        %275 = vxpose.xlu0.b32.cont [3/16] %v227, 128
        %276 = vxpose.xlu0.b32.cont [4/16] %v228, 128
        %277 = vxpose.xlu0.b32.cont [5/16] %v229, 128
        %278 = vxpose.xlu0.b32.cont [6/16] %v230, 128
        %279 = vxpose.xlu0.b32.cont [7/16] %v231, 128
        %280 = vxpose.xlu0.b32.cont [8/16] %v232, 128
        %281 = vxpose.xlu0.b32.cont [9/16] %v233, 128
        %282 = vxpose.xlu0.b32.cont [10/16] %v234, 128
        %283 = vxpose.xlu0.b32.cont [11/16] %v235, 128
        %284 = vxpose.xlu0.b32.cont [12/16] %v236, 128
        %285 = vxpose.xlu0.b32.cont [13/16] %v237, 128
        %286 = vxpose.xlu0.b32.cont [14/16] %v238, 128
        %287 = vxpose.xlu0.b32.cont [15/16] %v239, 128
        %288 = vxpose.xlu0.b32.end [16/16] %v240, 128
        %v289 = vpop.trf.xlu0
        %v290 = vpop.trf.xlu0
        %v291 = vpop.trf.xlu0
        %v292 = vpop.trf.xlu0
        %v293 = vpop.trf.xlu0
        %v294 = vpop.trf.xlu0
        %v295 = vpop.trf.xlu0
        %v296 = vpop.trf.xlu0
        %v297 = vpop.trf.xlu0
        %v298 = vpop.trf.xlu0
        %v299 = vpop.trf.xlu0
        %v300 = vpop.trf.xlu0
        %v301 = vpop.trf.xlu0
        %v302 = vpop.trf.xlu0
        %v303 = vpop.trf.xlu0
        %v304 = vpop.trf.xlu0
        %v305 = vadd.f32 %v257, %v258
        %v306 = vadd.f32 %v305, %v259
        %v307 = vadd.f32 %v306, %v260
        %v308 = vrot.slane %v307, 4
        %v309 = vadd.f32 %v307, %v308
        %v310 = vrot.slane %v309, 2
        %v311 = vadd.f32 %v309, %v310
        %v312 = vrot.slane %v311, 1
        %v313 = vadd.f32 %v311, %v312
        %v314 = vadd.f32 %v289, %v290
        %v315 = vadd.f32 %v314, %v291
        %v316 = vadd.f32 %v315, %v292
        %v317 = vrot.slane %v316, 4
        %v318 = vadd.f32 %v316, %v317
        %v319 = vrot.slane %v318, 2
        %v320 = vadd.f32 %v318, %v319
        %v321 = vrot.slane %v320, 1
        %v322 = vadd.f32 %v320, %v321
        %v323 = vrcp.pop 32.0
        %v324 = vmul.f32 %v313, %v323
        %v325 = vmul.f32 %v322, %v323
        %v326 = vsub.f32 %v257, %v324
        %v327 = vsub.f32 %v289, %v325
        %v328 = vsub.f32 %v258, %v324
        %v329 = vsub.f32 %v290, %v325
        %v330 = vsub.f32 %v259, %v324
        %v331 = vsub.f32 %v291, %v325
        %v332 = vsub.f32 %v260, %v324
        %v333 = vsub.f32 %v292, %v325
        %v334 = vmul.f32 %v326, %v326
        %v335 = vmul.f32 %v327, %v327
        %v336 = vmul.f32 %v328, %v328
        %v337 = vmul.f32 %v329, %v329
        %v338 = vmul.f32 %v330, %v330
        %v339 = vmul.f32 %v331, %v331
        %v340 = vmul.f32 %v332, %v332
        %v341 = vmul.f32 %v333, %v333
        %v342 = vadd.f32 %v334, %v336
        %v343 = vadd.f32 %v342, %v338
        %v344 = vadd.f32 %v343, %v340
        %v345 = vrot.slane %v344, 4
        %v346 = vadd.f32 %v344, %v345
        %v347 = vrot.slane %v346, 2
        %v348 = vadd.f32 %v346, %v347
        %v349 = vrot.slane %v348, 1
        %v350 = vadd.f32 %v348, %v349
        %v351 = vadd.f32 %v335, %v337
        %v352 = vadd.f32 %v351, %v339
        %v353 = vadd.f32 %v352, %v341
        %v354 = vrot.slane %v353, 4
        %v355 = vadd.f32 %v353, %v354
        %v356 = vrot.slane %v355, 2
        %v357 = vadd.f32 %v355, %v356
        %v358 = vrot.slane %v357, 1
        %v359 = vadd.f32 %v357, %v358
        %v360 = vmul.f32 %v350, %v323
        %v361 = vmul.f32 %v359, %v323
        %v362 = vadd.f32 %v360, 1e-05
        %v363 = vadd.f32 %v361, 1e-05
        %v364 = vrsqrt.pop %v362
        %v365 = vrsqrt.pop %v363
        %v366 = vmul.f32 %v326, %v364
        %v367 = vmul.f32 %v327, %v365
        %v368 = vmul.f32 %v328, %v364
        %v369 = vmul.f32 %v329, %v365
        %v370 = vmul.f32 %v330, %v364
        %v371 = vmul.f32 %v331, %v365
        %v372 = vmul.f32 %v332, %v364
        %v373 = vmul.f32 %v333, %v365
        %375 = vset.pattern.permute.xlu0 0
        %376 = vperm.xlu0 %375, %v205
        %v377 = vpop.permute.xlu0 %376
        %380 = vset.pattern.permute.xlu0 0
        %381 = vperm.xlu0 %380, %v206
        %v382 = vpop.permute.xlu0 %381
        %385 = vset.pattern.permute.xlu0 0
        %386 = vperm.xlu0 %385, %v207
        %v387 = vpop.permute.xlu0 %386
        %390 = vset.pattern.permute.xlu0 0
        %391 = vperm.xlu0 %390, %v208
        %v392 = vpop.permute.xlu0 %391
        %vm394 = vcmask 261120
        %v396 = vsel %vm394, %v196, 0
        %v399 = vsel %vm394, %v197, 0
        %v402 = vsel %vm394, %v198, 0
        %v405 = vsel %vm394, %v199, 0
        %407 = vmatprep.subr.mxu0 %v367
        %408 = vmatpush1.msra.mxu0 %v366
        %409 = vmatprep.subr.mxu0 %v369
        %410 = vmatpush1.msra.mxu0 %v368
        %411 = vmatprep.subr.mxu0 %v371
        %412 = vmatpush1.msra.mxu0 %v370
        %413 = vmatprep.subr.mxu0 %v373
        %414 = vmatpush1.msra.mxu0 %v372
        %415 = vmatprep.subr.mxu0 0.0
        %416 = vmatpush1.msra.mxu0 0.0
        %417 = vmatprep.subr.mxu0 0.0
        %418 = vmatpush1.msra.mxu0 0.0
        %419 = vmatprep.subr.mxu0 0.0
        %420 = vmatpush1.msra.mxu0 0.0
        %421 = vmatprep.subr.mxu0 0.0
        %422 = vmatpush1.msra.mxu0 0.0
        %423 = vmatprep.subr.mxu0 0.0
        %424 = vmatpush1.msra.mxu0 0.0
        %425 = vmatprep.subr.mxu0 0.0
        %426 = vmatpush1.msra.mxu0 0.0
        %427 = vmatprep.subr.mxu0 0.0
        %428 = vmatpush1.msra.mxu0 0.0
        %429 = vmatprep.subr.mxu0 0.0
        %430 = vmatpush1.msra.mxu0 0.0
        %431 = vmatprep.subr.mxu0 0.0
        %432 = vmatpush1.msra.mxu0 0.0
        %433 = vmatprep.subr.mxu0 0.0
        %434 = vmatpush1.msra.mxu0 0.0
        %435 = vmatprep.subr.mxu0 0.0
        %436 = vmatpush1.msra.mxu0 0.0
        %437 = vmatprep.subr.mxu0 0.0
        %438 = vmatpush1.msra.mxu0 0.0
        %439 = vmatprep.subr.mxu0 0.0
        %440 = vmatpush1.msra.mxu0 0.0
        %441 = vmatprep.subr.mxu0 0.0
        %442 = vmatpush1.msra.mxu0 0.0
        %443 = vmatprep.subr.mxu0 0.0
        %444 = vmatpush1.msra.mxu0 0.0
        %445 = vmatprep.subr.mxu0 0.0
        %446 = vmatpush1.msra.mxu0 0.0
        %447 = vmatprep.subr.mxu0 0.0
        %448 = vmatpush1.msra.mxu0 0.0
        %449 = vmatprep.subr.mxu0 0.0
        %450 = vmatpush1.msra.mxu0 0.0
        %451 = vmatprep.subr.mxu0 0.0
        %452 = vmatpush1.msra.mxu0 0.0
        %453 = vmatprep.subr.mxu0 0.0
        %454 = vmatpush1.msra.mxu0 0.0
        %455 = vmatprep.subr.mxu0 0.0
        %456 = vmatpush1.msra.mxu0 0.0
        %457 = vmatprep.subr.mxu0 0.0
        %458 = vmatpush1.msra.mxu0 0.0
        %459 = vmatprep.subr.mxu0 0.0
        %460 = vmatpush1.msra.mxu0 0.0
        %461 = vmatprep.subr.mxu0 0.0
        %462 = vmatpush1.msra.mxu0 0.0
        %463 = vmatprep.subr.mxu0 0.0
        %464 = vmatpush1.msra.mxu0 0.0
        %465 = vmatprep.subr.mxu0 0.0
        %466 = vmatpush1.msra.mxu0 0.0
        %467 = vmatprep.subr.mxu0 0.0
        %468 = vmatpush1.msra.mxu0 0.0
        %469 = vmatprep.subr.mxu0 0.0
        %470 = vmatpush1.msra.mxu0 0.0
        %471 = vmatprep.mubr.f32.mxu0 0.0
        %472 = vmatmul.mubr.f32.gmra.mrb[0].mxu0 %v396
        %v473 = vpop.f32.mrb[0].mxu0
        %v474 = vadd.f32 %v377, %v473
        %v475 = vpop.f32.mrb[0].mxu0
        %v476 = vadd.f32 %v377, %v475
        %477 = vmatprep.mubr.f32.mxu0 0.0
        %478 = vmatmul.mubr.f32.gmra.mrb[0].mxu0 %v399
        %v479 = vpop.f32.mrb[0].mxu0
        %v480 = vadd.f32 %v382, %v479
        %v481 = vpop.f32.mrb[0].mxu0
        %v482 = vadd.f32 %v382, %v481
        %483 = vmatprep.mubr.f32.mxu0 0.0
        %484 = vmatmul.mubr.f32.gmra.mrb[0].mxu0 %v402
        %v485 = vpop.f32.mrb[0].mxu0
        %v486 = vadd.f32 %v387, %v485
        %v487 = vpop.f32.mrb[0].mxu0
        %v488 = vadd.f32 %v387, %v487
        %489 = vmatprep.mubr.f32.mxu0 0.0
        %490 = vmatmul.mubr.f32.gmra.mrb[0].mxu0 %v405
        %v491 = vpop.f32.mrb[0].mxu0
        %v492 = vadd.f32 %v392, %v491
        %v493 = vpop.f32.mrb[0].mxu0
        %v494 = vadd.f32 %v392, %v493
        %495 = vdwg.mxu0
        %v496 = vmul.f32 %v474, %v474
        %v497 = vmul.f32 %v476, %v476
        %v498 = vmul.f32 %v480, %v480
        %v499 = vmul.f32 %v482, %v482
        %v500 = vmul.f32 %v486, %v486
        %v501 = vmul.f32 %v488, %v488
        %v502 = vmul.f32 %v492, %v492
        %v503 = vmul.f32 %v494, %v494
        %v504 = vmul.f32 %v474, %v496
        %v505 = vmul.f32 %v476, %v497
        %v506 = vmul.f32 %v480, %v498
        %v507 = vmul.f32 %v482, %v499
        %v508 = vmul.f32 %v486, %v500
        %v509 = vmul.f32 %v488, %v501
        %v510 = vmul.f32 %v492, %v502
        %v511 = vmul.f32 %v494, %v503
        %v512 = vmul.f32 %v504, 0.044715
        %v513 = vmul.f32 %v505, 0.044715
        %v514 = vmul.f32 %v506, 0.044715
        %v515 = vmul.f32 %v507, 0.044715
        %v516 = vmul.f32 %v508, 0.044715
        %v517 = vmul.f32 %v509, 0.044715
        %v518 = vmul.f32 %v510, 0.044715
        %v519 = vmul.f32 %v511, 0.044715
        %v520 = vadd.f32 %v474, %v512
        %v521 = vadd.f32 %v476, %v513
        %v522 = vadd.f32 %v480, %v514
        %v523 = vadd.f32 %v482, %v515
        %v524 = vadd.f32 %v486, %v516
        %v525 = vadd.f32 %v488, %v517
        %v526 = vadd.f32 %v492, %v518
        %v527 = vadd.f32 %v494, %v519
        %v528 = vmul.f32 %v520, 0.7978846
        %v529 = vmul.f32 %v521, 0.7978846
        %v530 = vmul.f32 %v522, 0.7978846
        %v531 = vmul.f32 %v523, 0.7978846
        %v532 = vmul.f32 %v524, 0.7978846
        %v533 = vmul.f32 %v525, 0.7978846
        %v534 = vmul.f32 %v526, 0.7978846
        %v535 = vmul.f32 %v527, 0.7978846
        %v536 = vtanh.pop %v528
        %v537 = vtanh.pop %v529
        %v538 = vtanh.pop %v530
        %v539 = vtanh.pop %v531
        %v540 = vtanh.pop %v532
        %v541 = vtanh.pop %v533
        %v542 = vtanh.pop %v534
        %v543 = vtanh.pop %v535
        %v544 = vadd.f32 %v536, 1.0
        %v545 = vadd.f32 %v537, 1.0
        %v546 = vadd.f32 %v538, 1.0
        %v547 = vadd.f32 %v539, 1.0
        %v548 = vadd.f32 %v540, 1.0
        %v549 = vadd.f32 %v541, 1.0
        %v550 = vadd.f32 %v542, 1.0
        %v551 = vadd.f32 %v543, 1.0
        %v552 = vmul.f32 %v544, 0.5
        %v553 = vmul.f32 %v545, 0.5
        %v554 = vmul.f32 %v546, 0.5
        %v555 = vmul.f32 %v547, 0.5
        %v556 = vmul.f32 %v548, 0.5
        %v557 = vmul.f32 %v549, 0.5
        %v558 = vmul.f32 %v550, 0.5
        %v559 = vmul.f32 %v551, 0.5
        %v560 = vmul.f32 %v474, %v552
        %v561 = vmul.f32 %v476, %v553
        %v562 = vmul.f32 %v480, %v554
        %v563 = vmul.f32 %v482, %v555
        %v564 = vmul.f32 %v486, %v556
        %v565 = vmul.f32 %v488, %v557
        %v566 = vmul.f32 %v492, %v558
        %v567 = vmul.f32 %v494, %v559
        %v568 = vadd.f32 %v560, %v562
        %v569 = vadd.f32 %v568, %v564
        %v570 = vadd.f32 %v569, %v566
        %v571 = vrot.slane %v570, 4
        %v572 = vadd.f32 %v570, %v571
        %v573 = vrot.slane %v572, 2
        %v574 = vadd.f32 %v572, %v573
        %v575 = vrot.slane %v574, 1
        %v576 = vadd.f32 %v574, %v575
        %v577 = vadd.f32 %v561, %v563
        %v578 = vadd.f32 %v577, %v565
        %v579 = vadd.f32 %v578, %v567
        %v580 = vrot.slane %v579, 4
        %v581 = vadd.f32 %v579, %v580
        %v582 = vrot.slane %v581, 2
        %v583 = vadd.f32 %v581, %v582
        %v584 = vrot.slane %v583, 1
        %v585 = vadd.f32 %v583, %v584
        %v586 = vmul.f32 %v576, %v323
        %v587 = vmul.f32 %v585, %v323
        %v588 = vsub.f32 %v560, %v586
        %v589 = vsub.f32 %v561, %v587
        %v590 = vsub.f32 %v562, %v586
        %v591 = vsub.f32 %v563, %v587
        %v592 = vsub.f32 %v564, %v586
        %v593 = vsub.f32 %v565, %v587
        %v594 = vsub.f32 %v566, %v586
        %v595 = vsub.f32 %v567, %v587
        %v596 = vmul.f32 %v588, %v588
        %v597 = vmul.f32 %v589, %v589
        %v598 = vmul.f32 %v590, %v590
        %v599 = vmul.f32 %v591, %v591
        %v600 = vmul.f32 %v592, %v592
        %v601 = vmul.f32 %v593, %v593
        %v602 = vmul.f32 %v594, %v594
        %v603 = vmul.f32 %v595, %v595
        %v604 = vadd.f32 %v596, %v598
        %v605 = vadd.f32 %v604, %v600
        %v606 = vadd.f32 %v605, %v602
        %v607 = vrot.slane %v606, 4
        %v608 = vadd.f32 %v606, %v607
        %v609 = vrot.slane %v608, 2
        %v610 = vadd.f32 %v608, %v609
        %v611 = vrot.slane %v610, 1
        %v612 = vadd.f32 %v610, %v611
        %v613 = vadd.f32 %v597, %v599
        %v614 = vadd.f32 %v613, %v601
        %v615 = vadd.f32 %v614, %v603
        %v616 = vrot.slane %v615, 4
        %v617 = vadd.f32 %v615, %v616
        %v618 = vrot.slane %v617, 2
        %v619 = vadd.f32 %v617, %v618
        %v620 = vrot.slane %v619, 1
        %v621 = vadd.f32 %v619, %v620
        %v622 = vmul.f32 %v612, %v323
        %v623 = vmul.f32 %v621, %v323
        %v624 = vadd.f32 %v622, 1e-05
        %v625 = vadd.f32 %v623, 1e-05
        %v626 = vrsqrt.pop %v624
        %v627 = vrsqrt.pop %v625
        %v628 = vmul.f32 %v588, %v626
        %v629 = vmul.f32 %v589, %v627
        %v630 = vmul.f32 %v590, %v626
        %v631 = vmul.f32 %v591, %v627
        %v632 = vmul.f32 %v592, %v626
        %v633 = vmul.f32 %v593, %v627
        %v634 = vmul.f32 %v594, %v626
        %v635 = vmul.f32 %v595, %v627
        %636 = vset.pattern.permute.xlu0 1
        %637 = vperm.xlu0 %636, %v205
        %v638 = vpop.permute.xlu0 %637
        %640 = vset.pattern.permute.xlu0 1
        %641 = vperm.xlu0 %640, %v206
        %v642 = vpop.permute.xlu0 %641
        %644 = vset.pattern.permute.xlu0 1
        %645 = vperm.xlu0 %644, %v207
        %v646 = vpop.permute.xlu0 %645
        %648 = vset.pattern.permute.xlu0 1
        %649 = vperm.xlu0 %648, %v208
        %v650 = vpop.permute.xlu0 %649
        %v653 = vsel %vm394, %v200, 0
        %v656 = vsel %vm394, %v201, 0
        %v659 = vsel %vm394, %v202, 0
        %v662 = vsel %vm394, %v203, 0
        %664 = vmatprep.subr.mxu0 %v629
        %665 = vmatpush1.msra.mxu0 %v628
        %666 = vmatprep.subr.mxu0 %v631
        %667 = vmatpush1.msra.mxu0 %v630
        %668 = vmatprep.subr.mxu0 %v633
        %669 = vmatpush1.msra.mxu0 %v632
        %670 = vmatprep.subr.mxu0 %v635
        %671 = vmatpush1.msra.mxu0 %v634
        %672 = vmatprep.subr.mxu0 0.0
        %673 = vmatpush1.msra.mxu0 0.0
        %674 = vmatprep.subr.mxu0 0.0
        %675 = vmatpush1.msra.mxu0 0.0
        %676 = vmatprep.subr.mxu0 0.0
        %677 = vmatpush1.msra.mxu0 0.0
        %678 = vmatprep.subr.mxu0 0.0
        %679 = vmatpush1.msra.mxu0 0.0
        %680 = vmatprep.subr.mxu0 0.0
        %681 = vmatpush1.msra.mxu0 0.0
        %682 = vmatprep.subr.mxu0 0.0
        %683 = vmatpush1.msra.mxu0 0.0
        %684 = vmatprep.subr.mxu0 0.0
        %685 = vmatpush1.msra.mxu0 0.0
        %686 = vmatprep.subr.mxu0 0.0
        %687 = vmatpush1.msra.mxu0 0.0
        %688 = vmatprep.subr.mxu0 0.0
        %689 = vmatpush1.msra.mxu0 0.0
        %690 = vmatprep.subr.mxu0 0.0
        %691 = vmatpush1.msra.mxu0 0.0
        %692 = vmatprep.subr.mxu0 0.0
        %693 = vmatpush1.msra.mxu0 0.0
        %694 = vmatprep.subr.mxu0 0.0
        %695 = vmatpush1.msra.mxu0 0.0
        %696 = vmatprep.subr.mxu0 0.0
        %697 = vmatpush1.msra.mxu0 0.0
        %698 = vmatprep.subr.mxu0 0.0
        %699 = vmatpush1.msra.mxu0 0.0
        %700 = vmatprep.subr.mxu0 0.0
        %701 = vmatpush1.msra.mxu0 0.0
        %702 = vmatprep.subr.mxu0 0.0
        %703 = vmatpush1.msra.mxu0 0.0
        %704 = vmatprep.subr.mxu0 0.0
        %705 = vmatpush1.msra.mxu0 0.0
        %706 = vmatprep.subr.mxu0 0.0
        %707 = vmatpush1.msra.mxu0 0.0
        %708 = vmatprep.subr.mxu0 0.0
        %709 = vmatpush1.msra.mxu0 0.0
        %710 = vmatprep.subr.mxu0 0.0
        %711 = vmatpush1.msra.mxu0 0.0
        %712 = vmatprep.subr.mxu0 0.0
        %713 = vmatpush1.msra.mxu0 0.0
        %714 = vmatprep.subr.mxu0 0.0
        %715 = vmatpush1.msra.mxu0 0.0
        %716 = vmatprep.subr.mxu0 0.0
        %717 = vmatpush1.msra.mxu0 0.0
        %718 = vmatprep.subr.mxu0 0.0
        %719 = vmatpush1.msra.mxu0 0.0
        %720 = vmatprep.subr.mxu0 0.0
        %721 = vmatpush1.msra.mxu0 0.0
        %722 = vmatprep.subr.mxu0 0.0
        %723 = vmatpush1.msra.mxu0 0.0
        %724 = vmatprep.subr.mxu0 0.0
        %725 = vmatpush1.msra.mxu0 0.0
        %726 = vmatprep.subr.mxu0 0.0
        %727 = vmatpush1.msra.mxu0 0.0
        %728 = vmatprep.mubr.f32.mxu0 0.0
        %729 = vmatmul.mubr.f32.gmra.mrb[0].mxu0 %v653
        %v730 = vpop.f32.mrb[0].mxu0
        %v731 = vadd.f32 %v638, %v730
        %v732 = vpop.f32.mrb[0].mxu0
        %v733 = vadd.f32 %v638, %v732
        %734 = vmatprep.mubr.f32.mxu0 0.0
        %735 = vmatmul.mubr.f32.gmra.mrb[0].mxu0 %v656
        %v736 = vpop.f32.mrb[0].mxu0
        %v737 = vadd.f32 %v642, %v736
        %v738 = vpop.f32.mrb[0].mxu0
        %v739 = vadd.f32 %v642, %v738
        %740 = vmatprep.mubr.f32.mxu0 0.0
        %741 = vmatmul.mubr.f32.gmra.mrb[0].mxu0 %v659
        %v742 = vpop.f32.mrb[0].mxu0
        %v743 = vadd.f32 %v646, %v742
        %v744 = vpop.f32.mrb[0].mxu0
        %v745 = vadd.f32 %v646, %v744
        %746 = vmatprep.mubr.f32.mxu0 0.0
        %747 = vmatmul.mubr.f32.gmra.mrb[0].mxu0 %v662
        %v748 = vpop.f32.mrb[0].mxu0
        %v749 = vadd.f32 %v650, %v748
        %v750 = vpop.f32.mrb[0].mxu0
        %v751 = vadd.f32 %v650, %v750
        %752 = vdwg.mxu0
        %v753 = vmul.f32 %v731, %v731
        %v754 = vmul.f32 %v733, %v733
        %v755 = vmul.f32 %v737, %v737
        %v756 = vmul.f32 %v739, %v739
        %v757 = vmul.f32 %v743, %v743
        %v758 = vmul.f32 %v745, %v745
        %v759 = vmul.f32 %v749, %v749
        %v760 = vmul.f32 %v751, %v751
        %v761 = vmul.f32 %v731, %v753
        %v762 = vmul.f32 %v733, %v754
        %v763 = vmul.f32 %v737, %v755
        %v764 = vmul.f32 %v739, %v756
        %v765 = vmul.f32 %v743, %v757
        %v766 = vmul.f32 %v745, %v758
        %v767 = vmul.f32 %v749, %v759
        %v768 = vmul.f32 %v751, %v760
        %v769 = vmul.f32 %v761, 0.044715
        %v770 = vmul.f32 %v762, 0.044715
        %v771 = vmul.f32 %v763, 0.044715
        %v772 = vmul.f32 %v764, 0.044715
        %v773 = vmul.f32 %v765, 0.044715
        %v774 = vmul.f32 %v766, 0.044715
        %v775 = vmul.f32 %v767, 0.044715
        %v776 = vmul.f32 %v768, 0.044715
        %v777 = vadd.f32 %v731, %v769
        %v778 = vadd.f32 %v733, %v770
        %v779 = vadd.f32 %v737, %v771
        %v780 = vadd.f32 %v739, %v772
        %v781 = vadd.f32 %v743, %v773
        %v782 = vadd.f32 %v745, %v774
        %v783 = vadd.f32 %v749, %v775
        %v784 = vadd.f32 %v751, %v776
        %v785 = vmul.f32 %v777, 0.7978846
        %v786 = vmul.f32 %v778, 0.7978846
        %v787 = vmul.f32 %v779, 0.7978846
        %v788 = vmul.f32 %v780, 0.7978846
        %v789 = vmul.f32 %v781, 0.7978846
        %v790 = vmul.f32 %v782, 0.7978846
        %v791 = vmul.f32 %v783, 0.7978846
        %v792 = vmul.f32 %v784, 0.7978846
        %v793 = vtanh.pop %v785
        %v794 = vtanh.pop %v786
        %v795 = vtanh.pop %v787
        %v796 = vtanh.pop %v788
        %v797 = vtanh.pop %v789
        %v798 = vtanh.pop %v790
        %v799 = vtanh.pop %v791
        %v800 = vtanh.pop %v792
        %v801 = vadd.f32 %v793, 1.0
        %v802 = vadd.f32 %v794, 1.0
        %v803 = vadd.f32 %v795, 1.0
        %v804 = vadd.f32 %v796, 1.0
        %v805 = vadd.f32 %v797, 1.0
        %v806 = vadd.f32 %v798, 1.0
        %v807 = vadd.f32 %v799, 1.0
        %v808 = vadd.f32 %v800, 1.0
        %v809 = vmul.f32 %v801, 0.5
        %v810 = vmul.f32 %v802, 0.5
        %v811 = vmul.f32 %v803, 0.5
        %v812 = vmul.f32 %v804, 0.5
        %v813 = vmul.f32 %v805, 0.5
        %v814 = vmul.f32 %v806, 0.5
        %v815 = vmul.f32 %v807, 0.5
        %v816 = vmul.f32 %v808, 0.5
        %v817 = vmul.f32 %v731, %v809
        %v818 = vmul.f32 %v733, %v810
        %v819 = vmul.f32 %v737, %v811
        %v820 = vmul.f32 %v739, %v812
        %v821 = vmul.f32 %v743, %v813
        %v822 = vmul.f32 %v745, %v814
        %v823 = vmul.f32 %v749, %v815
        %v824 = vmul.f32 %v751, %v816
        %v825 = vadd.f32 %v817, %v819
        %v826 = vadd.f32 %v825, %v821
        %v827 = vadd.f32 %v826, %v823
        %v828 = vrot.slane %v827, 4
        %v829 = vadd.f32 %v827, %v828
        %v830 = vrot.slane %v829, 2
        %v831 = vadd.f32 %v829, %v830
        %v832 = vrot.slane %v831, 1
        %v833 = vadd.f32 %v831, %v832
        %v834 = vadd.f32 %v818, %v820
        %v835 = vadd.f32 %v834, %v822
        %v836 = vadd.f32 %v835, %v824
        %v837 = vrot.slane %v836, 4
        %v838 = vadd.f32 %v836, %v837
        %v839 = vrot.slane %v838, 2
        %v840 = vadd.f32 %v838, %v839
        %v841 = vrot.slane %v840, 1
        %v842 = vadd.f32 %v840, %v841
        %v843 = vmul.f32 %v833, %v323
        %v844 = vmul.f32 %v842, %v323
        %v845 = vsub.f32 %v817, %v843
        %v846 = vsub.f32 %v818, %v844
        %v847 = vsub.f32 %v819, %v843
        %v848 = vsub.f32 %v820, %v844
        %v849 = vsub.f32 %v821, %v843
        %v850 = vsub.f32 %v822, %v844
        %v851 = vsub.f32 %v823, %v843
        %v852 = vsub.f32 %v824, %v844
        %v853 = vmul.f32 %v845, %v845
        %v854 = vmul.f32 %v846, %v846
        %v855 = vmul.f32 %v847, %v847
        %v856 = vmul.f32 %v848, %v848
        %v857 = vmul.f32 %v849, %v849
        %v858 = vmul.f32 %v850, %v850
        %v859 = vmul.f32 %v851, %v851
        %v860 = vmul.f32 %v852, %v852
        %v861 = vadd.f32 %v853, %v855
        %v862 = vadd.f32 %v861, %v857
        %v863 = vadd.f32 %v862, %v859
        %v864 = vrot.slane %v863, 4
        %v865 = vadd.f32 %v863, %v864
        %v866 = vrot.slane %v865, 2
        %v867 = vadd.f32 %v865, %v866
        %v868 = vrot.slane %v867, 1
        %v869 = vadd.f32 %v867, %v868
        %v870 = vadd.f32 %v854, %v856
        %v871 = vadd.f32 %v870, %v858
        %v872 = vadd.f32 %v871, %v860
        %v873 = vrot.slane %v872, 4
        %v874 = vadd.f32 %v872, %v873
        %v875 = vrot.slane %v874, 2
        %v876 = vadd.f32 %v874, %v875
        %v877 = vrot.slane %v876, 1
        %v878 = vadd.f32 %v876, %v877
        %v879 = vmul.f32 %v869, %v323
        %v880 = vmul.f32 %v878, %v323
        %v881 = vadd.f32 %v879, 1e-05
        %v882 = vadd.f32 %v880, 1e-05
        %v883 = vrsqrt.pop %v881
        %v884 = vrsqrt.pop %v882
        %v886 = vsel %vm394, %v204, 0
        %888 = vmatprep.subr.mxu0 %v846
        %889 = vmatpush1.msra.mxu0 %v845
        %890 = vmatprep.subr.mxu0 %v848
        %891 = vmatpush1.msra.mxu0 %v847
        %892 = vmatprep.subr.mxu0 %v850
        %893 = vmatpush1.msra.mxu0 %v849
        %894 = vmatprep.subr.mxu0 %v852
        %895 = vmatpush1.msra.mxu0 %v851
        %896 = vmatprep.subr.mxu0 0.0
        %897 = vmatpush1.msra.mxu0 0.0
        %898 = vmatprep.subr.mxu0 0.0
        %899 = vmatpush1.msra.mxu0 0.0
        %900 = vmatprep.subr.mxu0 0.0
        %901 = vmatpush1.msra.mxu0 0.0
        %902 = vmatprep.subr.mxu0 0.0
        %903 = vmatpush1.msra.mxu0 0.0
        %904 = vmatprep.subr.mxu0 0.0
        %905 = vmatpush1.msra.mxu0 0.0
        %906 = vmatprep.subr.mxu0 0.0
        %907 = vmatpush1.msra.mxu0 0.0
        %908 = vmatprep.subr.mxu0 0.0
        %909 = vmatpush1.msra.mxu0 0.0
        %910 = vmatprep.subr.mxu0 0.0
        %911 = vmatpush1.msra.mxu0 0.0
        %912 = vmatprep.subr.mxu0 0.0
        %913 = vmatpush1.msra.mxu0 0.0
        %914 = vmatprep.subr.mxu0 0.0
        %915 = vmatpush1.msra.mxu0 0.0
        %916 = vmatprep.subr.mxu0 0.0
        %917 = vmatpush1.msra.mxu0 0.0
        %918 = vmatprep.subr.mxu0 0.0
        %919 = vmatpush1.msra.mxu0 0.0
        %920 = vmatprep.subr.mxu0 0.0
        %921 = vmatpush1.msra.mxu0 0.0
        %922 = vmatprep.subr.mxu0 0.0
        %923 = vmatpush1.msra.mxu0 0.0
        %924 = vmatprep.subr.mxu0 0.0
        %925 = vmatpush1.msra.mxu0 0.0
        %926 = vmatprep.subr.mxu0 0.0
        %927 = vmatpush1.msra.mxu0 0.0
        %928 = vmatprep.subr.mxu0 0.0
        %929 = vmatpush1.msra.mxu0 0.0
        %930 = vmatprep.subr.mxu0 0.0
        %931 = vmatpush1.msra.mxu0 0.0
        %932 = vmatprep.subr.mxu0 0.0
        %933 = vmatpush1.msra.mxu0 0.0
        %934 = vmatprep.subr.mxu0 0.0
        %935 = vmatpush1.msra.mxu0 0.0
        %936 = vmatprep.subr.mxu0 0.0
        %937 = vmatpush1.msra.mxu0 0.0
        %938 = vmatprep.subr.mxu0 0.0
        %939 = vmatpush1.msra.mxu0 0.0
        %940 = vmatprep.subr.mxu0 0.0
        %941 = vmatpush1.msra.mxu0 0.0
        %942 = vmatprep.subr.mxu0 0.0
        %943 = vmatpush1.msra.mxu0 0.0
        %944 = vmatprep.subr.mxu0 0.0
        %945 = vmatpush1.msra.mxu0 0.0
        %946 = vmatprep.subr.mxu0 0.0
        %947 = vmatpush1.msra.mxu0 0.0
        %948 = vmatprep.subr.mxu0 0.0
        %949 = vmatpush1.msra.mxu0 0.0
        %950 = vmatprep.subr.mxu0 0.0
        %951 = vmatpush1.msra.mxu0 0.0
        %952 = vmatprep.mubr.f32.mxu0 0.0
        %953 = vmatmul.mubr.f32.gmra.mrb[0].mxu0 %v886
        %v954 = vpop.f32.mrb[0].mxu0
        %v955 = vadd.f32 0.0, %v954
        %v956 = vpop.f32.mrb[0].mxu0
        %v957 = vadd.f32 0.0, %v956
        %958 = vdwg.mxu0
        %v959 = vmul.f32 %v955, %v883
        %v960 = vmul.f32 %v957, %v884
        %961 = vset.pattern.permute.xlu0 2
        %962 = vperm.xlu0 %961, %v205
        %v963 = vpop.permute.xlu0 %962
        %v965 = vadd.f32 %v959, %v963
        %v966 = vadd.f32 %v960, %v963
        %v967 = vxor.u32 %v965, 2147483648
        %v968 = vxor.u32 %v966, 2147483648
        %v969 = vmul.f32 %v967, 1.442695
        %v970 = vpow.pop %v969
        %v971 = vmul.f32 %v968, 1.442695
        %v972 = vpow.pop %v971
        %v973 = vadd.f32 %v970, 1.0
        %v974 = vadd.f32 %v972, 1.0
        %v975 = vrcp.pop %v973
        %v976 = vmul.f32 1.0, %v975
        %v977 = vrcp.pop %v974
        %v978 = vmul.f32 1.0, %v977
        %v979 = vmul.f32 %v976, 9.0
        %v980 = vmul.f32 %v978, 9.0
        %v981 = vadd.f32 %v979, 1.0
        %v982 = vadd.f32 %v980, 1.0
        %v985 = vcombine.low %v981, %v982
        %v987 = vunpack.c.l.s4 1966171168
        %v988 = vunpack.c.0.s8 %v987
        %v989 = vlaneseq
        %v990 = vshrl.u32 %v989, 7
        %v991 = vsub.s32 %v988, %v990
        %v992 = vrot.slane %v985, %v991
        %v994 = vunpack.c.l.s4 1966171168
        %v995 = vunpack.c.0.s8 %v994
        %v996 = vlaneseq
        %v997 = vshrl.u32 %v996, 7
        %v998 = vsub.s32 %v995, %v997
        %v999 = vrot.slane %v992, %v998
        %v1001 = vlaneseq
        %vm1002 = vcmp.ge.s32.totalorder %v1001, 0
        %vm1003 = vcmp.lt.s32.totalorder %v1001, 256
        %vm1004 = vmand %vm1002, %vm1003
        %1005 = vst.msk [vmem:[%s176] sm:$0x3] %vm1004, %v999
        %s1006 = sand.u32 %s93, 1
        %s1007 = scalar_lea.sflag [#allocation3], %s1006
        %s1008 = sand.u32 %s93, 1
        %s1009 = smul.addr %s1008, 2
        %s1010 = scalar_lea.vmem [#allocation2], %s1009
        // Predicated region
        $region33: #{tpu_custom_call.1} parent=31 // pred_check
          %p1011 = pneg %p103
        $region34: #{tpu_custom_call.1} parent=31 // pred_check_branch
          %1013 = sbr.rel (%p1011) target = $region36
        $region35: #{tpu_custom_call.1} parent=31 // pred_region
          %s1014 = smul.u32 2, %s17
          %s1015 = ssub.s32 3, %s1014
          %p1016 = scmp.lt.s32.totalorder %s1015, 2
          %s1017 = scalar_select %p1016, %s1015, 2
          %s1018 = smul.u32 16, %s1017
          %s1020 = ssub.s32 32, %s1018
          %1021 = vsyncadd %s1007, %s1020
          %p1022 = scmp.ne.s32.totalorder 0, %s1018
          %s1023 = smul.addr %s1014, 16
          %s1024 = scalar_lea.hbm %s3, %s1023
          %s1025 = sshll.u32 %s1017, 4
          %s1026 = sshll.u32 %s1010, 4
          %s1027 = int_to_ptr.vmem [resolvable:$true] %s1026
          %1029 = dma.vmem_to_hbm [thread:$0]  (%p1022), %s1027, %s1025, %s1024, %s1007
        $region36: #{tpu_custom_call.1} parent=31 // pred_fallthru
          _
      $region32: #{tpu_custom_call.1} parent=5 // pred_fallthru
        _
      %p1030 = scmp.le.s32.totalorder 2, %s12
      // Predicated region
      $region37: #{tpu_custom_call.1} parent=5 // pred_check
        %p1031 = pneg %p1030
      $region38: #{tpu_custom_call.1} parent=5 // pred_check_branch
        %1033 = sbr.rel (%p1031) target = $region40
      $region39: #{tpu_custom_call.1} parent=5 // pred_region
        %s1034 = ssub.s32 %s12, 2
        // Predicated region
        $region41: #{tpu_custom_call.1} parent=39 // pred_check
          %p1035 = pneg %p109
        $region42: #{tpu_custom_call.1} parent=39 // pred_check_branch
          %1037 = sbr.rel (%p1035) target = $region44
        $region43: #{tpu_custom_call.1} parent=39 // pred_region
          %s1038 = sand.u32 %s94, 1
          %s1039 = scalar_lea.sflag [#allocation3], %s1038
          %s1040 = sand.u32 %s94, 1
          %s1041 = smul.addr %s1040, 2
          %s1042 = scalar_lea.vmem [#allocation2], %s1041
          %1043 = dma.done %s1039, 32
        $region44: #{tpu_custom_call.1} parent=39 // pred_fallthru
          _
      $region40: #{tpu_custom_call.1} parent=5 // pred_fallthru
        _
    $region6: #{tpu_custom_call.1} parent=1 // loop_footer
      %s16 = sadd.s32 1, %s12
    $region7: #{tpu_custom_call.1} parent=1 // loop_footer_branch
      %11 = sbr.rel target = $region3
    $region8: #{tpu_custom_call.1} parent=1 // loop_exit
      _
    %1044 = vsyncpa [#allocation3], 1
    %s1045 = scalar_lea.sflag [#allocation3], 1
    %1046 = vsyncpa %s1045, 1

</llo_original>
